<compile_context>
chip_gen: v7x
topology: tpu7x:2x2x1
jax: 0.10.0
libtpu: 0.0.40
codegen_flags: <defaults>
</compile_context>

<pallas_src>
import jax
import jax.numpy as jnp
from jax.experimental import pallas as pl
from jax.experimental.pallas import tpu as pltpu


def _pick_tile(total, *, target, align):
    """Largest divisor of `total` that is a multiple of `align` and <= target;
    falls back to the full extent (always a legal block shape)."""
    if total <= target:
        return total
    for cand in range(target, align - 1, -1):
        if cand % align == 0 and total % cand == 0:
            return cand
    return total


def _broadcast_kernel(mean_col_ref, var_col_ref, mean_ref, var_ref):
    """mean_col_ref / var_col_ref: (tr, 1) per-row scalars (already include the
    Linear, bias and ReLU).  mean_ref / var_ref: (tr, th) output blocks of the
    flattened (N*C, hw_pad) slabs.  Pure lane-broadcast + store."""
    tr, th = mean_ref.shape
    mean_ref[...] = jnp.broadcast_to(mean_col_ref[...], (tr, th)).astype(mean_ref.dtype)
    var_ref[...] = jnp.broadcast_to(var_col_ref[...], (tr, th)).astype(var_ref.dtype)


def code_generator_layer_forward(x, shared_code, w_mean, b_mean, w_var, b_var,
                                 *, out_dtype=None):
    """x: (N, C, h, w) NCHW (only the shape is used); shared_code: (N, c5).
    w_mean / w_var: (c5, C) (torch `Linear.weight.T`); b_mean / b_var: (C,).
    Returns (fc_mean_np, fc_var_np), each (N, C, h, w)."""
    N, C, h, w = x.shape
    rows, hw = N * C, h * w
    if out_dtype is None:
        # Follow input/param dtype; pass jnp.bfloat16 explicitly to halve the
        # dominant HBM writeback if the consumer tolerates it.
        out_dtype = jnp.result_type(shared_code.dtype, w_mean.dtype)

    # ---- Hoisted compute (tiny, run once in plain XLA) -----------------------
    w_cat = jnp.concatenate([w_mean, w_var], axis=1).astype(jnp.float32)   # (c5, 2C)
    b_cat = jnp.concatenate([b_mean, b_var]).astype(jnp.float32)           # (2C,)
    fc = jnp.dot(shared_code.astype(jnp.float32), w_cat,
                 precision=jax.lax.Precision.HIGHEST) + b_cat              # (N, 2C)
    fc_mean_col = fc[:, :C].reshape(rows, 1)                               # (N*C, 1)
    fc_var_col = jnp.maximum(fc[:, C:], 0.0).reshape(rows, 1)              # ReLU

    # ---- Output tiling: lane-dense, 128-aligned, unmasked stores -------------
    hw_pad = ((hw + 127) // 128) * 128
    tr = _pick_tile(rows, target=256, align=8)
    th = _pick_tile(hw_pad, target=2048, align=128)
    gr, gc = rows // tr, hw_pad // th

    # Put the axis with more blocks first so the leading "parallel" axis that
    # megacore shards (v7x, 2 TCs) has >= 2 blocks whenever possible.
    if gc > gr:
        grid = (gc, gr)
        col_map = lambda j, i: (i, 0)
        out_map = lambda j, i: (i, j)
    else:
        grid = (gr, gc)
        col_map = lambda i, j: (i, 0)
        out_map = lambda i, j: (i, j)

    out_shapes = (jax.ShapeDtypeStruct((rows, hw_pad), out_dtype),
                  jax.ShapeDtypeStruct((rows, hw_pad), out_dtype))

    mean_flat, var_flat = pl.pallas_call(
        _broadcast_kernel,
        out_shape=out_shapes,
        grid=grid,
        in_specs=[pl.BlockSpec((tr, 1), col_map),
                  pl.BlockSpec((tr, 1), col_map)],
        out_specs=[pl.BlockSpec((tr, th), out_map),
                   pl.BlockSpec((tr, th), out_map)],
        compiler_params=pltpu.CompilerParams(
            dimension_semantics=("parallel", "parallel")),
    )(fc_mean_col, fc_var_col)

    # Strip the lane padding (no-op slice when hw % 128 == 0), then the
    # (rows, hw) -> (N, C, h, w) reshape is row-major identical, i.e. free.
    if hw_pad != hw:
        mean_flat = mean_flat[:, :hw]
        var_flat = var_flat[:, :hw]
    return mean_flat.reshape(N, C, h, w), var_flat.reshape(N, C, h, w)


if __name__ == "__main__":
    # Small shapes consistent with the module:
    #   args.initial_channel = 2  ->  c5 = 2 * 16 = 32
    #   out_channel = C = 4 (must equal the input channel count for the .view)
    N, C, h, w = 2, 4, 16, 16
    c5 = 2 * 16

    key = jax.random.PRNGKey(0)
    k_x, k_sc, k_wm, k_bm, k_wv, k_bv = jax.random.split(key, 6)

    x = jax.random.normal(k_x, (N, C, h, w), dtype=jnp.float32)
    shared_code = jax.random.normal(k_sc, (N, c5), dtype=jnp.float32)

    # Deterministic synthetic parameters (torch Linear-style uniform bound).
    bound = 1.0 / (c5 ** 0.5)
    w_mean = jax.random.uniform(k_wm, (c5, C), minval=-bound, maxval=bound, dtype=jnp.float32)
    b_mean = jax.random.uniform(k_bm, (C,), minval=-bound, maxval=bound, dtype=jnp.float32)
    w_var = jax.random.uniform(k_wv, (c5, C), minval=-bound, maxval=bound, dtype=jnp.float32)
    b_var = jax.random.uniform(k_bv, (C,), minval=-bound, maxval=bound, dtype=jnp.float32)

    fc_mean_np, fc_var_np = code_generator_layer_forward(
        x, shared_code, w_mean, b_mean, w_var, b_var)
    jax.block_until_ready((fc_mean_np, fc_var_np))

    # Pure-JAX reference check.
    ref_mean = shared_code @ w_mean + b_mean                     # (N, C)
    ref_var = jnp.maximum(shared_code @ w_var + b_var, 0.0)      # (N, C)
    ref_mean_np = jnp.broadcast_to(ref_mean[:, :, None, None], (N, C, h, w))
    ref_var_np = jnp.broadcast_to(ref_var[:, :, None, None], (N, C, h, w))

    assert fc_mean_np.shape == (N, C, h, w) and fc_var_np.shape == (N, C, h, w)
    assert jnp.allclose(fc_mean_np, ref_mean_np, atol=1e-5, rtol=1e-5)
    assert jnp.allclose(fc_var_np, ref_var_np, atol=1e-5, rtol=1e-5)

    print("KERNEL_OK")
</pallas_src>

<mosaic_0001>
module attributes {stable_mosaic.version = 11 : i64} {
  func.func @_broadcast_kernel(%arg0: i32, %arg1: i32, %arg2: memref<8x1xf32, #tpu.memory_space<vmem>>, %arg3: memref<8x1xf32, #tpu.memory_space<vmem>>, %arg4: memref<8x256xf32, #tpu.memory_space<vmem>>, %arg5: memref<8x256xf32, #tpu.memory_space<vmem>>) attributes {dimension_semantics = [#tpu.dimension_semantics<parallel>, #tpu.dimension_semantics<parallel>], iteration_bounds = array<i64: 1, 1>, scalar_prefetch = 0 : i64, scratch_operands = 0 : i64, tpu.core_type = #tpu.core_type<tc>, window_params = [{transform_indices = @transform_0, window_bounds = array<i64: 8, 1>}, {transform_indices = @transform_1, window_bounds = array<i64: 8, 1>}, {transform_indices = @transform_2, window_bounds = array<i64: 8, 256>}, {transform_indices = @transform_3, window_bounds = array<i64: 8, 256>}]} {
    %c0 = arith.constant 0 : index
    %c0_0 = arith.constant 0 : index
    %0 = vector.load %arg2[%c0, %c0_0] : memref<8x1xf32, #tpu.memory_space<vmem>>, vector<8x1xf32>
    %1 = vector.shape_cast %0 : vector<8x1xf32> to vector<8x1xf32>
    %2 = vector.broadcast %1 : vector<8x1xf32> to vector<8x256xf32>
    %c0_1 = arith.constant 0 : index
    %c0_2 = arith.constant 0 : index
    %3 = vector.load %arg4[%c0_1, %c0_2] : memref<8x256xf32, #tpu.memory_space<vmem>>, vector<8x256xf32>
    tpu.vector_store %arg4[%c0_1, %c0_2], %2 {strides = array<i32>} : memref<8x256xf32, #tpu.memory_space<vmem>>, vector<8x256xf32>,
    %c0_3 = arith.constant 0 : index
    %c0_4 = arith.constant 0 : index
    %4 = vector.load %arg3[%c0_3, %c0_4] : memref<8x1xf32, #tpu.memory_space<vmem>>, vector<8x1xf32>
    %5 = vector.shape_cast %4 : vector<8x1xf32> to vector<8x1xf32>
    %6 = vector.broadcast %5 : vector<8x1xf32> to vector<8x256xf32>
    %c0_5 = arith.constant 0 : index
    %c0_6 = arith.constant 0 : index
    %7 = vector.load %arg5[%c0_5, %c0_6] : memref<8x256xf32, #tpu.memory_space<vmem>>, vector<8x256xf32>
    tpu.vector_store %arg5[%c0_5, %c0_6], %6 {strides = array<i32>} : memref<8x256xf32, #tpu.memory_space<vmem>>, vector<8x256xf32>,
    return
  }
  func.func @transform_0(%arg0: i32, %arg1: i32) -> (i32, i32) {
    %c0_i32 = arith.constant 0 : i32
    %c0_i32_0 = arith.constant 0 : i32
    return %arg0, %c0_i32 : i32, i32
  }
  func.func @transform_1(%arg0: i32, %arg1: i32) -> (i32, i32) {
    %c0_i32 = arith.constant 0 : i32
    %c0_i32_0 = arith.constant 0 : i32
    return %arg0, %c0_i32 : i32, i32
  }
  func.func @transform_2(%arg0: i32, %arg1: i32) -> (i32, i32) {
    %c0_i32 = arith.constant 0 : i32
    return %arg0, %arg1 : i32, i32
  }
  func.func @transform_3(%arg0: i32, %arg1: i32) -> (i32, i32) {
    %c0_i32 = arith.constant 0 : i32
    return %arg0, %arg1 : i32, i32
  }
}

</mosaic_0001>

<llo_original>
// kernel: tpu_custom_call.1
$region0: #{tpu_custom_call.1}
  #allocation0 [shape = 'u32[]', space=smem, size = 0x4, offset = 0x4, fixed_abs, tag = 'smem constant byte address 0x4 - core index']
  #allocation1 [shape = 'u32[144,128]{1,0:T(1,128)}', space=vmem, size = 0x12000, scoped, tag = 'internal scratch']
  %s0 = inlined_call_operand.vmem [shape: f32[8,1], index: 0, kind: input, shape index: {}]
  %s1 = inlined_call_operand.vmem [shape: f32[8,1], index: 1, kind: input, shape index: {}]
  %s2 = inlined_call_operand.hbm [shape: f32[8,256], index: 2, kind: output, shape index: {0}]
  %s3 = inlined_call_operand.hbm [shape: f32[8,256], index: 3, kind: output, shape index: {1}]
  %4 = xla_tuple %s2, %s3
  %s5 = sld [smem:[#allocation0]]
  $region26: #{tpu_custom_call.1} parent=0
    _
  %s7 = ssub.s32 1, %s5
  %s8 = scalar_select 0, %s7, %s5
  $region1: #{tpu_custom_call.1} parent=0
    #allocation2 [shape = 'u8[8192]{0}', space=vmem, size = 0x2000, scoped, tag = 'output window, operand 0, single buffered']
    #allocation3 [shape = 's32[1]{0}', space=sflag, size = 0x4, scoped, tag = 'scoped memory for tpu_custom_call.1']
    #allocation4 [shape = 'u8[8192]{0}', space=vmem, size = 0x2000, scoped, tag = 'output window, operand 1, single buffered']
    #allocation5 [shape = 's32[1]{0}', space=sflag, size = 0x4, scoped, tag = 'scoped memory for tpu_custom_call.1']
    %9 = vsyncpa [#allocation3], 0
    %10 = vsyncpa [#allocation5], 0
    // Predicated region
    $region2: #{tpu_custom_call.1} parent=1 // pred_check
      _
    $region3: #{tpu_custom_call.1} parent=1 // pred_check_branch
      %12 = sbr.rel (0) target = $region5
    $region4: #{tpu_custom_call.1} parent=1 // pred_region
      _
    $region5: #{tpu_custom_call.1} parent=1 // pred_fallthru
      _
    // Predicated region
    $region6: #{tpu_custom_call.1} parent=1 // pred_check
      _
    $region7: #{tpu_custom_call.1} parent=1 // pred_check_branch
      %14 = sbr.rel (0) target = $region9
    $region8: #{tpu_custom_call.1} parent=1 // pred_region
      _
    $region9: #{tpu_custom_call.1} parent=1 // pred_fallthru
      _
    %v15 = vld [vmem:[%s0] sm:$0xff]
    %17 = vset.pattern.permute.xlu0 0
    %18 = vperm.xlu0 %17, %v15
    %v19 = vpop.permute.xlu0 %18
    %21 = vst [vmem:[#allocation2] sm:$0xff] %v19
    %22 = vst [vmem:[#allocation2 + $0x8] sm:$0xff] %v19
    %v23 = vld [vmem:[%s1] sm:$0xff]
    %25 = vset.pattern.permute.xlu0 0
    %26 = vperm.xlu0 %25, %v23
    %v27 = vpop.permute.xlu0 %26
    %29 = vst [vmem:[#allocation4] sm:$0xff] %v27
    %30 = vst [vmem:[#allocation4 + $0x8] sm:$0xff] %v27
    // Predicated region
    $region10: #{tpu_custom_call.1} parent=1 // pred_check
      _
    $region11: #{tpu_custom_call.1} parent=1 // pred_check_branch
      %32 = sbr.rel (0) target = $region13
    $region12: #{tpu_custom_call.1} parent=1 // pred_region
      %s34 = ssub.s32 256, 256
      %35 = vsyncadd [#allocation3], %s34
      %s37 = sshll.u32 [#allocation2], 4
      %s38 = int_to_ptr.vmem [resolvable:$true] %s37
      %40 = dma.vmem_to_hbm [thread:$0]  %s38, 256, %s2, [#allocation3]
    $region13: #{tpu_custom_call.1} parent=1 // pred_fallthru
      _
    // Predicated region
    $region14: #{tpu_custom_call.1} parent=1 // pred_check
      _
    $region15: #{tpu_custom_call.1} parent=1 // pred_check_branch
      %42 = sbr.rel (0) target = $region17
    $region16: #{tpu_custom_call.1} parent=1 // pred_region
      %s44 = ssub.s32 256, 256
      %45 = vsyncadd [#allocation5], %s44
      %s47 = sshll.u32 [#allocation4], 4
      %s48 = int_to_ptr.vmem [resolvable:$true] %s47
      %50 = dma.vmem_to_hbm [thread:$0]  %s48, 256, %s3, [#allocation5]
    $region17: #{tpu_custom_call.1} parent=1 // pred_fallthru
      _
    // Predicated region
    $region18: #{tpu_custom_call.1} parent=1 // pred_check
      _
    $region19: #{tpu_custom_call.1} parent=1 // pred_check_branch
      %52 = sbr.rel (0) target = $region21
    $region20: #{tpu_custom_call.1} parent=1 // pred_region
      %53 = dma.done [#allocation3], 256
    $region21: #{tpu_custom_call.1} parent=1 // pred_fallthru
      _
    // Predicated region
    $region22: #{tpu_custom_call.1} parent=1 // pred_check
      _
    $region23: #{tpu_custom_call.1} parent=1 // pred_check_branch
      %55 = sbr.rel (0) target = $region25
    $region24: #{tpu_custom_call.1} parent=1 // pred_region
      %56 = dma.done [#allocation5], 256
    $region25: #{tpu_custom_call.1} parent=1 // pred_fallthru
      _
    %57 = vsyncpa [#allocation3], 1
    %58 = vsyncpa [#allocation5], 1

</llo_original>
